<compile_context>
chip_gen: v7x
topology: tpu7x:2x2x1
jax: 0.10.0
libtpu: 0.0.40
codegen_flags: <defaults>
</compile_context>

<pallas_src>
import functools

import jax
import jax.numpy as jnp
from jax.experimental import pallas as pl
from jax.experimental.pallas import tpu as pltpu

EPS = 1e-3  # LayerNormalization default eps


def _round_up(x, m):
    return (x + m - 1) // m * m


# ---------------------------------------------------------------------------
# Kernels
# ---------------------------------------------------------------------------

def _ffn_fused_kernel(x_ref, w1_ref, b1_ref, w2_ref, b2_ref,
                      gamma_ref, beta_ref, o_ref, *, matmul_dtype):
    """Block-diagonal fused path: one matmul pair, no lane split / concat."""
    x = x_ref[...].astype(jnp.float32)                       # (tm, d_hid), residual
    h = jnp.dot(x.astype(matmul_dtype), w1_ref[...],
                preferred_element_type=jnp.float32)
    h = jnp.maximum(h + b1_ref[...], 0.0)
    out = jnp.dot(h.astype(matmul_dtype), w2_ref[...],
                  preferred_element_type=jnp.float32) + b2_ref[...] + x

    # LayerNormalization (torch.std unbiased; divide by (sigma + eps)).
    n = out.shape[-1]
    mu = jnp.mean(out, axis=-1, keepdims=True)
    diff = out - mu
    var = jnp.sum(diff * diff, axis=-1, keepdims=True) / (n - 1)
    inv = pl.reciprocal(jnp.sqrt(var) + EPS, approx=False)    # exact; EUP-adjacent, off-crit-slot
    o_ref[...] = ((diff * inv) * gamma_ref[...] + beta_ref[...]).astype(o_ref.dtype)


def _ffn_split_kernel(x_ref,
                      w1c_ref, b1c_ref, w1p_ref, b1p_ref,
                      w2c_ref, b2c_ref, w2p_ref, b2p_ref,
                      gamma_ref, beta_ref, o_ref,
                      *, d_content, matmul_dtype):
    """Two-branch path for 128-aligned partitions; LN stats fused in vregs."""
    x = x_ref[...].astype(jnp.float32)
    xc = x[:, :d_content]
    xp = x[:, d_content:]

    hc = jnp.maximum(jnp.dot(xc.astype(matmul_dtype), w1c_ref[...],
                             preferred_element_type=jnp.float32) + b1c_ref[...], 0.0)
    oc = jnp.dot(hc.astype(matmul_dtype), w2c_ref[...],
                 preferred_element_type=jnp.float32) + b2c_ref[...] + xc

    hp = jnp.maximum(jnp.dot(xp.astype(matmul_dtype), w1p_ref[...],
                             preferred_element_type=jnp.float32) + b1p_ref[...], 0.0)
    op = jnp.dot(hp.astype(matmul_dtype), w2p_ref[...],
                 preferred_element_type=jnp.float32) + b2p_ref[...] + xp

    # LayerNorm statistics accumulated from the two halves while they are still
    # in vregs: no concat, no scratch store->load round trip.
    n = x.shape[-1]
    mu = (jnp.sum(oc, -1, keepdims=True) + jnp.sum(op, -1, keepdims=True)) / n
    dc = oc - mu
    dp = op - mu
    var = (jnp.sum(dc * dc, -1, keepdims=True)
           + jnp.sum(dp * dp, -1, keepdims=True)) / (n - 1)
    inv = pl.reciprocal(jnp.sqrt(var) + EPS, approx=False)

    gamma = gamma_ref[...]
    beta = beta_ref[...]
    # d_content is a multiple of 128 on this path -> lane-aligned half stores.
    o_ref[:, :d_content] = ((dc * inv) * gamma[:, :d_content]
                            + beta[:, :d_content]).astype(o_ref.dtype)
    o_ref[:, d_content:] = ((dp * inv) * gamma[:, d_content:]
                            + beta[:, d_content:]).astype(o_ref.dtype)


# ---------------------------------------------------------------------------
# One-time parameter preparation (done at "model load", not per call).
# ---------------------------------------------------------------------------

def prepare_ffn_params(params, d_hid, d_positional, *,
                       matmul_dtype=jnp.bfloat16, fuse_branches=None):
    d_content = d_hid - d_positional
    d_half = params["w1c"].shape[1]
    if fuse_branches is None:
        # Fuse unless the partition boundary and hidden dims are lane-aligned.
        fuse_branches = (d_content % 128 != 0 or d_positional % 128 != 0
                         or d_half % 128 != 0)

    prep = {
        "d_hid": d_hid, "d_positional": d_positional, "d_content": d_content,
        "d_half": d_half, "matmul_dtype": matmul_dtype,
        "fused": bool(fuse_branches),
        "gamma": params["gamma"].reshape(1, d_hid).astype(jnp.float32),
        "beta": params["beta"].reshape(1, d_hid).astype(jnp.float32),
    }

    if fuse_branches:
        dff = 2 * d_half
        dff_pad = _round_up(dff, 128)   # lane-pad hidden dim; zero cols/rows, relu(0)=0
        w1 = jnp.zeros((d_hid, dff_pad), jnp.float32)
        w1 = w1.at[:d_content, :d_half].set(params["w1c"])
        w1 = w1.at[d_content:, d_half:dff].set(params["w1p"])
        b1 = jnp.zeros((1, dff_pad), jnp.float32)
        b1 = b1.at[:, :d_half].set(params["b1c"].reshape(1, d_half))
        b1 = b1.at[:, d_half:dff].set(params["b1p"].reshape(1, d_half))
        w2 = jnp.zeros((dff_pad, d_hid), jnp.float32)
        w2 = w2.at[:d_half, :d_content].set(params["w2c"])
        w2 = w2.at[d_half:dff, d_content:].set(params["w2p"])
        b2 = jnp.concatenate([params["b2c"].reshape(1, d_content),
                              params["b2p"].reshape(1, d_positional)], axis=-1)
        prep.update(dff_pad=dff_pad,
                    w1=w1.astype(matmul_dtype), b1=b1,
                    w2=w2.astype(matmul_dtype), b2=b2.astype(jnp.float32))
    else:
        prep.update(
            w1c=params["w1c"].astype(matmul_dtype),
            b1c=params["b1c"].reshape(1, d_half).astype(jnp.float32),
            w1p=params["w1p"].astype(matmul_dtype),
            b1p=params["b1p"].reshape(1, d_half).astype(jnp.float32),
            w2c=params["w2c"].astype(matmul_dtype),
            b2c=params["b2c"].reshape(1, d_content).astype(jnp.float32),
            w2p=params["w2p"].astype(matmul_dtype),
            b2p=params["b2p"].reshape(1, d_positional).astype(jnp.float32))
    return prep


# ---------------------------------------------------------------------------
# Wrapper
# ---------------------------------------------------------------------------

def partitioned_ffn(x, prep, *, tm=None):
    """x: [T, d_hid] (f32 or bf16). Returns [T, d_hid] in x.dtype (eval forward)."""
    T, d_hid = x.shape
    assert d_hid == prep["d_hid"]
    matmul_dtype = prep["matmul_dtype"]
    in_item = x.dtype.itemsize
    out_item = in_item                       # output dtype mirrors the input dtype
    w_item = jnp.dtype(matmul_dtype).itemsize

    if prep["fused"]:
        dff_eff = prep["dff_pad"]
        const_bytes = (prep["w1"].size + prep["w2"].size) * w_item \
            + 4 * (prep["b1"].size + prep["b2"].size + 2 * d_hid)
    else:
        dff_eff = 2 * prep["d_half"]
        const_bytes = (prep["w1c"].size + prep["w1p"].size
                       + prep["w2c"].size + prep["w2p"].size) * w_item \
            + 4 * (prep["b1c"].size + prep["b1p"].size
                   + prep["b2c"].size + prep["b2p"].size + 2 * d_hid)

    # VMEM ceiling from real hardware capacity with ~20% headroom (no 32 MiB cap).
    try:
        vmem_cap = int(pltpu.get_tpu_info().vmem_capacity_bytes)
    except Exception:
        vmem_cap = 64 * 2**20     # conservative fallback (v7x per-core size)
    vmem_budget = int(0.8 * vmem_cap)

    # Rough per-row VMEM footprint: double-buffered x/out tiles + f32 working
    # set (upcast x, hidden activations, normalized output).
    per_row_vmem = (2 * in_item + 2 * out_item) * d_hid + 4 * (2 * d_hid + dff_eff)

    # Row tile: big enough that each grid step moves a few MiB of HBM traffic,
    # clamped so (a) it never exceeds the token count, (b) the grid has >= 2
    # steps (lets ("parallel",) shard rows across both TensorCores on v7x),
    # (c) the footprint fits the VMEM budget.
    row_align = max(8, 32 // min(in_item, out_item))   # 8 for f32, 16 for bf16
    if tm is None:
        per_row_hbm = d_hid * (in_item + out_item)
        tm = max(256, pl.cdiv(4 * 2**20, per_row_hbm))
    tm = max(row_align, _round_up(tm, row_align))
    tm = min(tm, _round_up(T, row_align))
    tm = min(tm, max(row_align, _round_up(pl.cdiv(T, 2), row_align)))
    avail = vmem_budget - const_bytes - (2 << 20)
    tm_fit = max(row_align, (avail // per_row_vmem) // row_align * row_align)
    tm = min(tm, tm_fit)

    grid = (pl.cdiv(T, tm),)                 # ragged tail -> Pallas partial block
    row_spec = pl.BlockSpec((tm, d_hid), lambda i: (i, 0))

    def const_spec(shape):
        # Grid-invariant operand: single VMEM copy (no double-buffer duplication).
        return pl.BlockSpec(shape, lambda i: (0, 0), pipeline_mode=pl.Buffered(1))

    if prep["fused"]:
        kernel = functools.partial(_ffn_fused_kernel, matmul_dtype=matmul_dtype)
        operands = (x, prep["w1"], prep["b1"], prep["w2"], prep["b2"],
                    prep["gamma"], prep["beta"])
    else:
        kernel = functools.partial(_ffn_split_kernel,
                                   d_content=prep["d_content"],
                                   matmul_dtype=matmul_dtype)
        operands = (x, prep["w1c"], prep["b1c"], prep["w1p"], prep["b1p"],
                    prep["w2c"], prep["b2c"], prep["w2p"], prep["b2p"],
                    prep["gamma"], prep["beta"])
    in_specs = [row_spec] + [const_spec(op.shape) for op in operands[1:]]

    return pl.pallas_call(
        kernel,
        out_shape=jax.ShapeDtypeStruct((T, d_hid), x.dtype),
        grid=grid,
        in_specs=in_specs,
        out_specs=row_spec,
        compiler_params=pltpu.CompilerParams(
            dimension_semantics=("parallel",),
            vmem_limit_bytes=vmem_budget),
    )(*operands)


# ---------------------------------------------------------------------------
# Pure-JAX reference (eval-mode PyTorch semantics)
# ---------------------------------------------------------------------------

def _reference(x, params, d_positional):
    d_hid = x.shape[-1]
    d_content = d_hid - d_positional
    xc = x[:, :d_content]
    xp = x[:, d_content:]
    oc = jnp.maximum(xc @ params["w1c"] + params["b1c"], 0.0) @ params["w2c"] + params["b2c"]
    op = jnp.maximum(xp @ params["w1p"] + params["b1p"], 0.0) @ params["w2p"] + params["b2p"]
    out = jnp.concatenate([oc, op], axis=-1) + x
    mu = jnp.mean(out, axis=-1, keepdims=True)
    sigma = jnp.std(out, axis=-1, keepdims=True, ddof=1)
    ln = (out - mu) / (sigma + EPS)
    return ln * params["gamma"] + params["beta"]


def _make_params(key, d_hid, d_positional, d_ff):
    d_content = d_hid - d_positional
    d_half = d_ff // 2
    ks = jax.random.split(key, 8)
    return {
        "w1c": 0.1 * jax.random.normal(ks[0], (d_content, d_half), jnp.float32),
        "b1c": 0.1 * jax.random.normal(ks[1], (1, d_half), jnp.float32),
        "w1p": 0.1 * jax.random.normal(ks[2], (d_positional, d_half), jnp.float32),
        "b1p": 0.1 * jax.random.normal(ks[3], (1, d_half), jnp.float32),
        "w2c": 0.1 * jax.random.normal(ks[4], (d_half, d_content), jnp.float32),
        "b2c": 0.1 * jax.random.normal(ks[5], (1, d_content), jnp.float32),
        "w2p": 0.1 * jax.random.normal(ks[6], (d_half, d_positional), jnp.float32),
        "b2p": 0.1 * jax.random.normal(ks[7], (1, d_positional), jnp.float32),
        "gamma": jnp.ones((1, d_hid), jnp.float32),   # a_2
        "beta": jnp.zeros((1, d_hid), jnp.float32),   # b_2
    }


if __name__ == "__main__":
    key = jax.random.PRNGKey(0)
    k_p1, k_x1, k_p2, k_x2 = jax.random.split(key, 4)

    # ---------------- Test 1: small, lane-unaligned partition (fused path) ---
    d_hid, d_positional, d_ff, T = 32, 8, 64, 40
    params = _make_params(k_p1, d_hid, d_positional, d_ff)
    x = jax.random.normal(k_x1, (T, d_hid), jnp.float32)
    ref = _reference(x, params, d_positional)

    # 1a) f32-matmul path: tight numerical check.
    prep_f32 = prepare_ffn_params(params, d_hid, d_positional, matmul_dtype=jnp.float32)
    assert prep_f32["fused"]
    out_f32 = jax.block_until_ready(partitioned_ffn(x, prep_f32))
    assert out_f32.shape == (T, d_hid)
    assert jnp.allclose(out_f32, ref, atol=1e-4, rtol=1e-4), "fused f32 mismatch"

    # 1b) default perf path: bf16 MXU matmuls, f32 accumulation + epilogue.
    prep_bf16 = prepare_ffn_params(params, d_hid, d_positional)
    out_bf16 = jax.block_until_ready(partitioned_ffn(x, prep_bf16))
    assert jnp.allclose(out_bf16, ref, atol=5e-2, rtol=5e-2), "fused bf16 mismatch"

    # 1c) bf16 activations in/out (halves x/out HBM traffic); LN stays f32 in-kernel.
    x_b = x.astype(jnp.bfloat16)
    ref_b = _reference(x_b.astype(jnp.float32), params, d_positional)
    out_b = jax.block_until_ready(partitioned_ffn(x_b, prep_bf16))
    assert out_b.dtype == jnp.bfloat16
    assert jnp.allclose(out_b.astype(jnp.float32), ref_b, atol=7e-2, rtol=7e-2), \
        "fused bf16-activation mismatch"

    # 1d) explicit small tile -> multi-step grid + ragged tail (no wrapper pad).
    out_tiled = jax.block_until_ready(partitioned_ffn(x, prep_bf16, tm=16))
    assert jnp.allclose(out_tiled, ref, atol=5e-2, rtol=5e-2), "tiled mismatch"

    # ---------------- Test 2: 128-aligned partition (split path) -------------
    d_hid2, d_positional2, d_ff2, T2 = 256, 128, 256, 40
    params2 = _make_params(k_p2, d_hid2, d_positional2, d_ff2)
    x2 = jax.random.normal(k_x2, (T2, d_hid2), jnp.float32)
    ref2 = _reference(x2, params2, d_positional2)

    prep2_f32 = prepare_ffn_params(params2, d_hid2, d_positional2, matmul_dtype=jnp.float32)
    assert not prep2_f32["fused"]
    out2_f32 = jax.block_until_ready(partitioned_ffn(x2, prep2_f32))
    assert out2_f32.shape == (T2, d_hid2)
    assert jnp.allclose(out2_f32, ref2, atol=1e-4, rtol=1e-4), "split f32 mismatch"

    prep2_bf16 = prepare_ffn_params(params2, d_hid2, d_positional2)
    out2_bf16 = jax.block_until_ready(partitioned_ffn(x2, prep2_bf16))
    assert jnp.allclose(out2_bf16, ref2, atol=5e-2, rtol=5e-2), "split bf16 mismatch"

    print("KERNEL_OK")
</pallas_src>

<mosaic_0001>
module attributes {stable_mosaic.version = 11 : i64} {
  func.func @_ffn_fused_kernel(%arg0: i32, %arg1: memref<24x32xf32, #tpu.memory_space<vmem>>, %arg2: memref<32x128xf32, #tpu.memory_space<vmem>>, %arg3: memref<1x128xf32, #tpu.memory_space<vmem>>, %arg4: memref<128x32xf32, #tpu.memory_space<vmem>>, %arg5: memref<1x32xf32, #tpu.memory_space<vmem>>, %arg6: memref<1x32xf32, #tpu.memory_space<vmem>>, %arg7: memref<1x32xf32, #tpu.memory_space<vmem>>, %arg8: memref<24x32xf32, #tpu.memory_space<vmem>>) attributes {dimension_semantics = [#tpu.dimension_semantics<parallel>], iteration_bounds = array<i64: 2>, scalar_prefetch = 0 : i64, scratch_operands = 0 : i64, tpu.core_type = #tpu.core_type<tc>, window_params = [{transform_indices = @transform_0, window_bounds = array<i64: 24, 32>}, {pipeline_mode = #tpu.pipeline_mode<synchronous>, transform_indices = @transform_1, window_bounds = array<i64: 32, 128>}, {pipeline_mode = #tpu.pipeline_mode<synchronous>, transform_indices = @transform_2, window_bounds = array<i64: 1, 128>}, {pipeline_mode = #tpu.pipeline_mode<synchronous>, transform_indices = @transform_3, window_bounds = array<i64: 128, 32>}, {pipeline_mode = #tpu.pipeline_mode<synchronous>, transform_indices = @transform_4, window_bounds = array<i64: 1, 32>}, {pipeline_mode = #tpu.pipeline_mode<synchronous>, transform_indices = @transform_5, window_bounds = array<i64: 1, 32>}, {pipeline_mode = #tpu.pipeline_mode<synchronous>, transform_indices = @transform_6, window_bounds = array<i64: 1, 32>}, {transform_indices = @transform_7, window_bounds = array<i64: 24, 32>}]} {
    %c0 = arith.constant 0 : index
    %c0_0 = arith.constant 0 : index
    %0 = vector.load %arg1[%c0, %c0_0] : memref<24x32xf32, #tpu.memory_space<vmem>>, vector<24x32xf32>
    %c0_1 = arith.constant 0 : index
    %c0_2 = arith.constant 0 : index
    %1 = vector.load %arg2[%c0_1, %c0_2] : memref<32x128xf32, #tpu.memory_space<vmem>>, vector<32x128xf32>
    %cst = arith.constant dense<0.000000e+00> : vector<24x128xf32>
    %2 = tpu.matmul %0, %1, %cst {dimension_numbers = #tpu.dot_dimension_numbers<[1], [0], [0], [1], [0, 0, 1, 1], [], []>} : vector<24x32xf32>, vector<32x128xf32>, vector<24x128xf32> -> vector<24x128xf32>
    %c0_3 = arith.constant 0 : index
    %c0_4 = arith.constant 0 : index
    %3 = vector.load %arg3[%c0_3, %c0_4] : memref<1x128xf32, #tpu.memory_space<vmem>>, vector<1x128xf32>
    %4 = vector.broadcast %3 : vector<1x128xf32> to vector<24x128xf32>
    %5 = arith.addf %2, %4 : vector<24x128xf32>
    %cst_5 = arith.constant 0.000000e+00 : f32
    %6 = vector.broadcast %cst_5 : f32 to vector<24x128xf32>
    %7 = arith.maximumf %5, %6 : vector<24x128xf32>
    %c0_6 = arith.constant 0 : index
    %c0_7 = arith.constant 0 : index
    %8 = vector.load %arg4[%c0_6, %c0_7] : memref<128x32xf32, #tpu.memory_space<vmem>>, vector<128x32xf32>
    %cst_8 = arith.constant dense<0.000000e+00> : vector<24x32xf32>
    %9 = tpu.matmul %7, %8, %cst_8 {dimension_numbers = #tpu.dot_dimension_numbers<[1], [0], [0], [1], [0, 0, 1, 1], [], []>} : vector<24x128xf32>, vector<128x32xf32>, vector<24x32xf32> -> vector<24x32xf32>
    %c0_9 = arith.constant 0 : index
    %c0_10 = arith.constant 0 : index
    %10 = vector.load %arg5[%c0_9, %c0_10] : memref<1x32xf32, #tpu.memory_space<vmem>>, vector<1x32xf32>
    %11 = vector.broadcast %10 : vector<1x32xf32> to vector<24x32xf32>
    %12 = arith.addf %9, %11 : vector<24x32xf32>
    %13 = arith.addf %12, %0 : vector<24x32xf32>
    %cst_11 = arith.constant dense<0.000000e+00> : vector<24xf32>
    %14 = vector.multi_reduction <add>, %13, %cst_11 [1] : vector<24x32xf32> to vector<24xf32>
    %15 = vector.shape_cast %14 : vector<24xf32> to vector<24x1xf32>
    %cst_12 = arith.constant 3.200000e+01 : f32
    %16 = vector.broadcast %cst_12 : f32 to vector<24x1xf32>
    %17 = arith.divf %15, %16 : vector<24x1xf32>
    %18 = vector.broadcast %17 : vector<24x1xf32> to vector<24x32xf32>
    %19 = arith.subf %13, %18 : vector<24x32xf32>
    %20 = arith.mulf %19, %19 : vector<24x32xf32>
    %cst_13 = arith.constant dense<0.000000e+00> : vector<24xf32>
    %21 = vector.multi_reduction <add>, %20, %cst_13 [1] : vector<24x32xf32> to vector<24xf32>
    %22 = vector.shape_cast %21 : vector<24xf32> to vector<24x1xf32>
    %cst_14 = arith.constant 3.100000e+01 : f32
    %23 = vector.broadcast %cst_14 : f32 to vector<24x1xf32>
    %24 = arith.divf %22, %23 : vector<24x1xf32>
    %25 = math.sqrt %24 : vector<24x1xf32>
    %cst_15 = arith.constant 1.000000e-03 : f32
    %26 = vector.broadcast %cst_15 : f32 to vector<24x1xf32>
    %27 = arith.addf %25, %26 : vector<24x1xf32>
    %28 = tpu.reciprocal %27 : vector<24x1xf32> -> vector<24x1xf32>
    %29 = vector.broadcast %28 : vector<24x1xf32> to vector<24x32xf32>
    %30 = arith.mulf %19, %29 : vector<24x32xf32>
    %c0_16 = arith.constant 0 : index
    %c0_17 = arith.constant 0 : index
    %31 = vector.load %arg6[%c0_16, %c0_17] : memref<1x32xf32, #tpu.memory_space<vmem>>, vector<1x32xf32>
    %32 = vector.broadcast %31 : vector<1x32xf32> to vector<24x32xf32>
    %33 = arith.mulf %30, %32 : vector<24x32xf32>
    %c0_18 = arith.constant 0 : index
    %c0_19 = arith.constant 0 : index
    %34 = vector.load %arg7[%c0_18, %c0_19] : memref<1x32xf32, #tpu.memory_space<vmem>>, vector<1x32xf32>
    %35 = vector.broadcast %34 : vector<1x32xf32> to vector<24x32xf32>
    %36 = arith.addf %33, %35 : vector<24x32xf32>
    %c0_20 = arith.constant 0 : index
    %c0_21 = arith.constant 0 : index
    %37 = vector.load %arg8[%c0_20, %c0_21] : memref<24x32xf32, #tpu.memory_space<vmem>>, vector<24x32xf32>
    tpu.vector_store %arg8[%c0_20, %c0_21], %36 {strides = array<i32>} : memref<24x32xf32, #tpu.memory_space<vmem>>, vector<24x32xf32>,
    return
  }
  func.func @transform_0(%arg0: i32) -> (i32, i32) {
    %c0_i32 = arith.constant 0 : i32
    %c0_i32_0 = arith.constant 0 : i32
    return %arg0, %c0_i32 : i32, i32
  }
  func.func @transform_1(%arg0: i32) -> (i32, i32) {
    %c0_i32 = arith.constant 0 : i32
    %c0_i32_0 = arith.constant 0 : i32
    %c0_i32_1 = arith.constant 0 : i32
    return %c0_i32, %c0_i32_0 : i32, i32
  }
  func.func @transform_2(%arg0: i32) -> (i32, i32) {
    %c0_i32 = arith.constant 0 : i32
    %c0_i32_0 = arith.constant 0 : i32
    %c0_i32_1 = arith.constant 0 : i32
    return %c0_i32, %c0_i32_0 : i32, i32
  }
  func.func @transform_3(%arg0: i32) -> (i32, i32) {
    %c0_i32 = arith.constant 0 : i32
    %c0_i32_0 = arith.constant 0 : i32
    %c0_i32_1 = arith.constant 0 : i32
    return %c0_i32, %c0_i32_0 : i32, i32
  }
  func.func @transform_4(%arg0: i32) -> (i32, i32) {
    %c0_i32 = arith.constant 0 : i32
    %c0_i32_0 = arith.constant 0 : i32
    %c0_i32_1 = arith.constant 0 : i32
    return %c0_i32, %c0_i32_0 : i32, i32
  }
  func.func @transform_5(%arg0: i32) -> (i32, i32) {
    %c0_i32 = arith.constant 0 : i32
    %c0_i32_0 = arith.constant 0 : i32
    %c0_i32_1 = arith.constant 0 : i32
    return %c0_i32, %c0_i32_0 : i32, i32
  }
  func.func @transform_6(%arg0: i32) -> (i32, i32) {
    %c0_i32 = arith.constant 0 : i32
    %c0_i32_0 = arith.constant 0 : i32
    %c0_i32_1 = arith.constant 0 : i32
    return %c0_i32, %c0_i32_0 : i32, i32
  }
  func.func @transform_7(%arg0: i32) -> (i32, i32) {
    %c0_i32 = arith.constant 0 : i32
    %c0_i32_0 = arith.constant 0 : i32
    return %arg0, %c0_i32 : i32, i32
  }
}

</mosaic_0001>

<llo_original>
// kernel: tpu_custom_call.1
$region0: #{tpu_custom_call.1}
  #allocation0 [shape = 'u32[]', space=smem, size = 0x4, offset = 0x4, fixed_abs, tag = 'smem constant byte address 0x4 - core index']
  #allocation1 [shape = 'u32[144,128]{1,0:T(1,128)}', space=vmem, size = 0x12000, scoped, tag = 'internal scratch']
  %s0 = inlined_call_operand.vmem [shape: f32[40,32], index: 0, kind: input, shape index: {}]
  %s1 = inlined_call_operand.vmem [shape: f32[32,128], index: 1, kind: input, shape index: {}]
  %s2 = inlined_call_operand.vmem [shape: f32[1,128], index: 2, kind: input, shape index: {}]
  %s3 = inlined_call_operand.vmem [shape: f32[128,32], index: 3, kind: input, shape index: {}]
  %s4 = inlined_call_operand.vmem [shape: f32[1,32], index: 4, kind: input, shape index: {}]
  %s5 = inlined_call_operand.vmem [shape: f32[1,32], index: 5, kind: input, shape index: {}]
  %s6 = inlined_call_operand.vmem [shape: f32[1,32], index: 6, kind: input, shape index: {}]
  %s7 = inlined_call_operand.vmem [shape: f32[40,32], index: 7, kind: output, shape index: {}]
  %s8 = sld [smem:[#allocation0]]
  $region109: #{tpu_custom_call.1} parent=0
    _
  %s10 = ssub.s32 1, %s8
  %s11 = scalar_select 0, %s10, %s8
  $region1: #{tpu_custom_call.1} parent=0
    #allocation2 [shape = 'u8[24576]{0}', space=vmem, size = 0x6000, scoped, tag = 'output window, operand 0']
    loop: start=0, step=1, limit=4
    $region2: #{tpu_custom_call.1} parent=1 // loop_pre_header
      _
    $region3: #{tpu_custom_call.1} parent=1 // loop_header
      %s13 = sphi 0, %s17
      %p14 = scmp.ge.s32.totalorder %s13, 4
      %s23 = sphi 0, %s25
      %s26 = sphi 0, %s23
      %s27 = sphi 0, %s26
      %s43 = sphi 0, %s27
      %s47 = sphi 0, %s47
      %s49 = sphi 0, %s47
      %s50 = sphi 0, %s49
      %s64 = sphi 0, %s50
      %s68 = sphi 0, %s68
      %s70 = sphi 0, %s68
      %s71 = sphi 0, %s70
      %s85 = sphi 0, %s71
      %s89 = sphi 0, %s89
      %s91 = sphi 0, %s89
      %s92 = sphi 0, %s91
      %s106 = sphi 0, %s92
      %s110 = sphi 0, %s110
      %s112 = sphi 0, %s110
      %s113 = sphi 0, %s112
      %s127 = sphi 0, %s113
      %s131 = sphi 0, %s131
      %s133 = sphi 0, %s131
      %s134 = sphi 0, %s133
      %s148 = sphi 0, %s134
      %s152 = sphi 0, %s152
      %s154 = sphi 0, %s152
      %s155 = sphi 0, %s154
      %s169 = sphi 0, %s155
      %s175 = sphi 0, %s177
      %s178 = sphi 0, %s175
      %s179 = sphi 0, %s178
      %s195 = sphi 0, %s179
    $region4: #{tpu_custom_call.1} parent=1 // loop_header_branch
      %16 = sbr.rel (%p14) target = $region8
    $region5: #{tpu_custom_call.1} parent=1 // loop_body
      %s18 = ssub.s32 %s13, 1
      %s19 = ssub.s32 %s13, 2
      %s20 = sadd.s32 %s13, 1
      %s21 = ssub.s32 %s13, %s20
      %p22 = scmp.eq.s32.totalorder %s21, 0
      %s24 = sadd.s32 %s23, 1
      %s25 = scalar_select %p22, %s23, %s24
      %p28 = pneg %p22
      %p29 = scmp.eq.s32.totalorder %s13, 1
      %p30 = por %p28, %p29
      %p31 = scmp.ne.s32.totalorder %s23, %s26
      %p32 = scmp.eq.s32.totalorder %s13, 0
      %p33 = por %p31, %p32
      %p34 = scmp.ne.s32.totalorder %s23, %s26
      %p35 = scmp.eq.s32.totalorder %s18, 1
      %p36 = por %p34, %p35
      %p37 = scmp.ne.s32.totalorder %s26, %s27
      %p38 = scmp.eq.s32.totalorder %s18, 0
      %p39 = por %p37, %p38
      %p40 = scmp.ne.s32.totalorder %s26, %s27
      %p41 = scmp.eq.s32.totalorder %s19, 1
      %p42 = por %p40, %p41
      %p44 = scmp.ne.s32.totalorder %s27, %s43
      %p45 = scmp.eq.s32.totalorder %s19, 0
      %p46 = por %p44, %p45
      %s48 = sadd.s32 %s47, 1
      %p51 = scmp.eq.s32.totalorder %s13, 1
      %p52 = scmp.ne.s32.totalorder %s47, %s49
      %p53 = scmp.eq.s32.totalorder %s13, 0
      %p54 = por %p52, %p53
      %p55 = scmp.ne.s32.totalorder %s47, %s49
      %p56 = scmp.eq.s32.totalorder %s18, 1
      %p57 = por %p55, %p56
      %p58 = scmp.ne.s32.totalorder %s49, %s50
      %p59 = scmp.eq.s32.totalorder %s18, 0
      %p60 = por %p58, %p59
      %p61 = scmp.ne.s32.totalorder %s49, %s50
      %p62 = scmp.eq.s32.totalorder %s19, 1
      %p63 = por %p61, %p62
      %p65 = scmp.ne.s32.totalorder %s50, %s64
      %p66 = scmp.eq.s32.totalorder %s19, 0
      %p67 = por %p65, %p66
      %s69 = sadd.s32 %s68, 1
      %p72 = scmp.eq.s32.totalorder %s13, 1
      %p73 = scmp.ne.s32.totalorder %s68, %s70
      %p74 = scmp.eq.s32.totalorder %s13, 0
      %p75 = por %p73, %p74
      %p76 = scmp.ne.s32.totalorder %s68, %s70
      %p77 = scmp.eq.s32.totalorder %s18, 1
      %p78 = por %p76, %p77
      %p79 = scmp.ne.s32.totalorder %s70, %s71
      %p80 = scmp.eq.s32.totalorder %s18, 0
      %p81 = por %p79, %p80
      %p82 = scmp.ne.s32.totalorder %s70, %s71
      %p83 = scmp.eq.s32.totalorder %s19, 1
      %p84 = por %p82, %p83
      %p86 = scmp.ne.s32.totalorder %s71, %s85
      %p87 = scmp.eq.s32.totalorder %s19, 0
      %p88 = por %p86, %p87
      %s90 = sadd.s32 %s89, 1
      %p93 = scmp.eq.s32.totalorder %s13, 1
      %p94 = scmp.ne.s32.totalorder %s89, %s91
      %p95 = scmp.eq.s32.totalorder %s13, 0
      %p96 = por %p94, %p95
      %p97 = scmp.ne.s32.totalorder %s89, %s91
      %p98 = scmp.eq.s32.totalorder %s18, 1
      %p99 = por %p97, %p98
      %p100 = scmp.ne.s32.totalorder %s91, %s92
      %p101 = scmp.eq.s32.totalorder %s18, 0
      %p102 = por %p100, %p101
      %p103 = scmp.ne.s32.totalorder %s91, %s92
      %p104 = scmp.eq.s32.totalorder %s19, 1
      %p105 = por %p103, %p104
      %p107 = scmp.ne.s32.totalorder %s92, %s106
      %p108 = scmp.eq.s32.totalorder %s19, 0
      %p109 = por %p107, %p108
      %s111 = sadd.s32 %s110, 1
      %p114 = scmp.eq.s32.totalorder %s13, 1
      %p115 = scmp.ne.s32.totalorder %s110, %s112
      %p116 = scmp.eq.s32.totalorder %s13, 0
      %p117 = por %p115, %p116
      %p118 = scmp.ne.s32.totalorder %s110, %s112
      %p119 = scmp.eq.s32.totalorder %s18, 1
      %p120 = por %p118, %p119
      %p121 = scmp.ne.s32.totalorder %s112, %s113
      %p122 = scmp.eq.s32.totalorder %s18, 0
      %p123 = por %p121, %p122
      %p124 = scmp.ne.s32.totalorder %s112, %s113
      %p125 = scmp.eq.s32.totalorder %s19, 1
      %p126 = por %p124, %p125
      %p128 = scmp.ne.s32.totalorder %s113, %s127
      %p129 = scmp.eq.s32.totalorder %s19, 0
      %p130 = por %p128, %p129
      %s132 = sadd.s32 %s131, 1
      %p135 = scmp.eq.s32.totalorder %s13, 1
      %p136 = scmp.ne.s32.totalorder %s131, %s133
      %p137 = scmp.eq.s32.totalorder %s13, 0
      %p138 = por %p136, %p137
      %p139 = scmp.ne.s32.totalorder %s131, %s133
      %p140 = scmp.eq.s32.totalorder %s18, 1
      %p141 = por %p139, %p140
      %p142 = scmp.ne.s32.totalorder %s133, %s134
      %p143 = scmp.eq.s32.totalorder %s18, 0
      %p144 = por %p142, %p143
      %p145 = scmp.ne.s32.totalorder %s133, %s134
      %p146 = scmp.eq.s32.totalorder %s19, 1
      %p147 = por %p145, %p146
      %p149 = scmp.ne.s32.totalorder %s134, %s148
      %p150 = scmp.eq.s32.totalorder %s19, 0
      %p151 = por %p149, %p150
      %s153 = sadd.s32 %s152, 1
      %p156 = scmp.eq.s32.totalorder %s13, 1
      %p157 = scmp.ne.s32.totalorder %s152, %s154
      %p158 = scmp.eq.s32.totalorder %s13, 0
      %p159 = por %p157, %p158
      %p160 = scmp.ne.s32.totalorder %s152, %s154
      %p161 = scmp.eq.s32.totalorder %s18, 1
      %p162 = por %p160, %p161
      %p163 = scmp.ne.s32.totalorder %s154, %s155
      %p164 = scmp.eq.s32.totalorder %s18, 0
      %p165 = por %p163, %p164
      %p166 = scmp.ne.s32.totalorder %s154, %s155
      %p167 = scmp.eq.s32.totalorder %s19, 1
      %p168 = por %p166, %p167
      %p170 = scmp.ne.s32.totalorder %s155, %s169
      %p171 = scmp.eq.s32.totalorder %s19, 0
      %p172 = por %p170, %p171
      %s173 = ssub.s32 %s13, %s20
      %p174 = scmp.eq.s32.totalorder %s173, 0
      %s176 = sadd.s32 %s175, 1
      %s177 = scalar_select %p174, %s175, %s176
      %p180 = pneg %p174
      %p181 = scmp.eq.s32.totalorder %s13, 1
      %p182 = por %p180, %p181
      %p183 = scmp.ne.s32.totalorder %s175, %s178
      %p184 = scmp.eq.s32.totalorder %s13, 0
      %p185 = por %p183, %p184
      %p186 = scmp.ne.s32.totalorder %s175, %s178
      %p187 = scmp.eq.s32.totalorder %s18, 1
      %p188 = por %p186, %p187
      %p189 = scmp.ne.s32.totalorder %s178, %s179
      %p190 = scmp.eq.s32.totalorder %s18, 0
      %p191 = por %p189, %p190
      %p192 = scmp.ne.s32.totalorder %s178, %s179
      %p193 = scmp.eq.s32.totalorder %s19, 1
      %p194 = por %p192, %p193
      %p196 = scmp.ne.s32.totalorder %s179, %s195
      %p197 = scmp.eq.s32.totalorder %s19, 0
      %p198 = por %p196, %p197
      %p199 = scmp.le.s32.totalorder 1, %s13
      %p200 = scmp.lt.s32.totalorder %s13, 3
      %p201 = pnand %p199, %p200
      %p202 = pneg %p201
      // Predicated region
      $region9: #{tpu_custom_call.1} parent=5 // pred_check
        _
      $region10: #{tpu_custom_call.1} parent=5 // pred_check_branch
        %204 = sbr.rel (%p201) target = $region12
      $region11: #{tpu_custom_call.1} parent=5 // pred_region
        %s205 = ssub.s32 %s13, 1
        // Predicated region
        $region13: #{tpu_custom_call.1} parent=11 // pred_check
          %p206 = pneg %p60
        $region14: #{tpu_custom_call.1} parent=11 // pred_check_branch
          %208 = sbr.rel (%p206) target = $region16
        $region15: #{tpu_custom_call.1} parent=11 // pred_region
          _
        $region16: #{tpu_custom_call.1} parent=11 // pred_fallthru
          _
        // Predicated region
        $region17: #{tpu_custom_call.1} parent=11 // pred_check
          %p209 = pneg %p81
        $region18: #{tpu_custom_call.1} parent=11 // pred_check_branch
          %211 = sbr.rel (%p209) target = $region20
        $region19: #{tpu_custom_call.1} parent=11 // pred_region
          _
        $region20: #{tpu_custom_call.1} parent=11 // pred_fallthru
          _
        // Predicated region
        $region21: #{tpu_custom_call.1} parent=11 // pred_check
          %p212 = pneg %p102
        $region22: #{tpu_custom_call.1} parent=11 // pred_check_branch
          %214 = sbr.rel (%p212) target = $region24
        $region23: #{tpu_custom_call.1} parent=11 // pred_region
          _
        $region24: #{tpu_custom_call.1} parent=11 // pred_fallthru
          _
        // Predicated region
        $region25: #{tpu_custom_call.1} parent=11 // pred_check
          %p215 = pneg %p123
        $region26: #{tpu_custom_call.1} parent=11 // pred_check_branch
          %217 = sbr.rel (%p215) target = $region28
        $region27: #{tpu_custom_call.1} parent=11 // pred_region
          _
        $region28: #{tpu_custom_call.1} parent=11 // pred_fallthru
          _
        // Predicated region
        $region29: #{tpu_custom_call.1} parent=11 // pred_check
          %p218 = pneg %p144
        $region30: #{tpu_custom_call.1} parent=11 // pred_check_branch
          %220 = sbr.rel (%p218) target = $region32
        $region31: #{tpu_custom_call.1} parent=11 // pred_region
          _
        $region32: #{tpu_custom_call.1} parent=11 // pred_fallthru
          _
        // Predicated region
        $region33: #{tpu_custom_call.1} parent=11 // pred_check
          %p221 = pneg %p165
        $region34: #{tpu_custom_call.1} parent=11 // pred_check_branch
          %223 = sbr.rel (%p221) target = $region36
        $region35: #{tpu_custom_call.1} parent=11 // pred_region
          _
        $region36: #{tpu_custom_call.1} parent=11 // pred_fallthru
          _
      $region12: #{tpu_custom_call.1} parent=5 // pred_fallthru
        _
      %p224 = scmp.lt.s32.totalorder %s13, 2
      // Predicated region
      $region37: #{tpu_custom_call.1} parent=5 // pred_check
        %p225 = pneg %p224
      $region38: #{tpu_custom_call.1} parent=5 // pred_check_branch
        %227 = sbr.rel (%p225) target = $region40
      $region39: #{tpu_custom_call.1} parent=5 // pred_region
        // Predicated region
        $region41: #{tpu_custom_call.1} parent=39 // pred_check
          %p228 = pneg %p33
        $region42: #{tpu_custom_call.1} parent=39 // pred_check_branch
          %230 = sbr.rel (%p228) target = $region44
        $region43: #{tpu_custom_call.1} parent=39 // pred_region
          %s231 = smul.u32 3, %s13
          %s232 = ssub.s32 5, %s231
          %p233 = scmp.lt.s32.totalorder %s232, 3
          %s234 = scalar_select %p233, %s232, 3
          %s235 = smul.u32 128, %s234
          %p236 = scmp.lt.s32.totalorder %s231, 4
          %s237 = scalar_select %p236, %s231, 4
          %s238 = smul.addr %s237, 8
          %s239 = scalar_lea.vmem %s0, %s238
          %s240 = smul.u32 3, %s13
          %s241 = ssub.s32 5, %s240
          %p242 = scmp.lt.s32.totalorder %s241, 3
          %s243 = scalar_select %p242, %s241, 3
          %s244 = smul.u32 128, %s243
        $region44: #{tpu_custom_call.1} parent=39 // pred_fallthru
          _
      $region40: #{tpu_custom_call.1} parent=5 // pred_fallthru
        _
      %p245 = scmp.le.s32.totalorder 1, %s13
      %p246 = scmp.lt.s32.totalorder %s13, 3
      %p247 = pnand %p245, %p246
      %p248 = pneg %p247
      // Predicated region
      $region45: #{tpu_custom_call.1} parent=5 // pred_check
        _
      $region46: #{tpu_custom_call.1} parent=5 // pred_check_branch
        %250 = sbr.rel (%p247) target = $region48
      $region47: #{tpu_custom_call.1} parent=5 // pred_region
        %s251 = ssub.s32 %s13, 1
        %s252 = smul.u32 3, %s18
        %s253 = ssub.s32 5, %s252
        %p254 = scmp.lt.s32.totalorder %s253, 3
        %s255 = scalar_select %p254, %s253, 3
        %s256 = smul.u32 128, %s255
        %p257 = scmp.lt.s32.totalorder %s252, 4
        %s258 = scalar_select %p257, %s252, 4
        %s259 = smul.addr %s258, 8
        %s260 = scalar_lea.vmem %s0, %s259
        %p261 = pneg %p39
        %p262 = pneg %p36
        %p263 = pneg %p60
        %p264 = pneg %p57
        %p265 = pneg %p81
        %p266 = pneg %p78
        %p267 = pneg %p102
        %p268 = pneg %p99
        %p269 = pneg %p123
        %p270 = pneg %p120
        %p271 = pneg %p144
        %p272 = pneg %p141
        %p273 = pneg %p165
        %p274 = pneg %p162
        %p275 = pneg %p191
        %p276 = pneg %p188
        %s277 = sand.u32 %s178, 1
        %s278 = sand.u32 %s178, 1
        %s279 = smul.addr %s278, 24
        %s280 = scalar_lea.vmem [#allocation2], %s279
        %s281 = smul.u32 3, %s18
        %s282 = ssub.s32 5, %s281
        %p283 = scmp.lt.s32.totalorder %s282, 3
        %s284 = scalar_select %p283, %s282, 3
        %s285 = smul.u32 128, %s284
        %p286 = scmp.lt.s32.totalorder %s281, 4
        %s287 = scalar_select %p286, %s281, 4
        %s288 = smul.addr %s287, 8
        %s289 = scalar_lea.vmem %s0, %s288
        %s290 = smul.u32 3, %s18
        %s291 = ssub.s32 5, %s290
        %p292 = scmp.lt.s32.totalorder %s291, 3
        %s293 = scalar_select %p292, %s291, 3
        %s294 = smul.u32 128, %s293
        %s295 = smul.u32 3, %s18
        %s296 = ssub.s32 5, %s295
        %p297 = scmp.lt.s32.totalorder %s296, 3
        %s298 = scalar_select %p297, %s296, 3
        %s299 = smul.u32 128, %s298
        %v300 = vld [vmem:[%s289] sm:$0xff]
        %v301 = vld [vmem:[%s289 + $0x8] sm:$0xff]
        %v302 = vld [vmem:[%s289 + $0x10] sm:$0xff]
        %v303 = vld [vmem:[%s1] sm:$0xff]
        %v304 = vld [vmem:[%s1 + $0x8] sm:$0xff]
        %v305 = vld [vmem:[%s1 + $0x10] sm:$0xff]
        %v306 = vld [vmem:[%s1 + $0x18] sm:$0xff]
        %v307 = vld [vmem:[%s2] sm:$0x1]
        %v309 = vlaneseq
        %v310 = vshrl.u32 %v309, 7
        %v311 = vsub.s32 0, %v310
        %v312 = vrot.slane %v307, %v311
        %vm314 = vcmask 261120
        %v316 = vsel %vm314, %v300, 0
        %v319 = vsel %vm314, %v301, 0
        %v322 = vsel %vm314, %v302, 0
        %324 = vmatprep.subr.mxu0 0.0
        %325 = vmatpush1.msra.mxu0 %v303
        %326 = vmatprep.subr.mxu0 0.0
        %327 = vmatpush1.msra.mxu0 %v304
        %328 = vmatprep.subr.mxu0 0.0
        %329 = vmatpush1.msra.mxu0 %v305
        %330 = vmatprep.subr.mxu0 0.0
        %331 = vmatpush1.msra.mxu0 %v306
        %332 = vmatprep.subr.mxu0 0.0
        %333 = vmatpush1.msra.mxu0 0.0
        %334 = vmatprep.subr.mxu0 0.0
        %335 = vmatpush1.msra.mxu0 0.0
        %336 = vmatprep.subr.mxu0 0.0
        %337 = vmatpush1.msra.mxu0 0.0
        %338 = vmatprep.subr.mxu0 0.0
        %339 = vmatpush1.msra.mxu0 0.0
        %340 = vmatprep.subr.mxu0 0.0
        %341 = vmatpush1.msra.mxu0 0.0
        %342 = vmatprep.subr.mxu0 0.0
        %343 = vmatpush1.msra.mxu0 0.0
        %344 = vmatprep.subr.mxu0 0.0
        %345 = vmatpush1.msra.mxu0 0.0
        %346 = vmatprep.subr.mxu0 0.0
        %347 = vmatpush1.msra.mxu0 0.0
        %348 = vmatprep.subr.mxu0 0.0
        %349 = vmatpush1.msra.mxu0 0.0
        %350 = vmatprep.subr.mxu0 0.0
        %351 = vmatpush1.msra.mxu0 0.0
        %352 = vmatprep.subr.mxu0 0.0
        %353 = vmatpush1.msra.mxu0 0.0
        %354 = vmatprep.subr.mxu0 0.0
        %355 = vmatpush1.msra.mxu0 0.0
        %356 = vmatprep.subr.mxu0 0.0
        %357 = vmatpush1.msra.mxu0 0.0
        %358 = vmatprep.subr.mxu0 0.0
        %359 = vmatpush1.msra.mxu0 0.0
        %360 = vmatprep.subr.mxu0 0.0
        %361 = vmatpush1.msra.mxu0 0.0
        %362 = vmatprep.subr.mxu0 0.0
        %363 = vmatpush1.msra.mxu0 0.0
        %364 = vmatprep.subr.mxu0 0.0
        %365 = vmatpush1.msra.mxu0 0.0
        %366 = vmatprep.subr.mxu0 0.0
        %367 = vmatpush1.msra.mxu0 0.0
        %368 = vmatprep.subr.mxu0 0.0
        %369 = vmatpush1.msra.mxu0 0.0
        %370 = vmatprep.subr.mxu0 0.0
        %371 = vmatpush1.msra.mxu0 0.0
        %372 = vmatprep.subr.mxu0 0.0
        %373 = vmatpush1.msra.mxu0 0.0
        %374 = vmatprep.subr.mxu0 0.0
        %375 = vmatpush1.msra.mxu0 0.0
        %376 = vmatprep.subr.mxu0 0.0
        %377 = vmatpush1.msra.mxu0 0.0
        %378 = vmatprep.subr.mxu0 0.0
        %379 = vmatpush1.msra.mxu0 0.0
        %380 = vmatprep.subr.mxu0 0.0
        %381 = vmatpush1.msra.mxu0 0.0
        %382 = vmatprep.subr.mxu0 0.0
        %383 = vmatpush1.msra.mxu0 0.0
        %384 = vmatprep.subr.mxu0 0.0
        %385 = vmatpush1.msra.mxu0 0.0
        %386 = vmatprep.subr.mxu0 0.0
        %387 = vmatpush1.msra.mxu0 0.0
        %388 = vmatprep.mubr.f32.mxu0 0.0
        %389 = vmatmul.mubr.f32.gmra.mrb[0].mxu0 %v316
        %v390 = vpop.f32.mrb[0].mxu0
        %v391 = vadd.f32 %v312, %v390
        %v392 = vpop.f32.mrb[0].mxu0
        %393 = vmatprep.mubr.f32.mxu0 0.0
        %394 = vmatmul.mubr.f32.gmra.mrb[0].mxu0 %v319
        %v395 = vpop.f32.mrb[0].mxu0
        %v396 = vadd.f32 %v312, %v395
        %v397 = vpop.f32.mrb[0].mxu0
        %398 = vmatprep.mubr.f32.mxu0 0.0
        %399 = vmatmul.mubr.f32.gmra.mrb[0].mxu0 %v322
        %v400 = vpop.f32.mrb[0].mxu0
        %v401 = vadd.f32 %v312, %v400
        %v402 = vpop.f32.mrb[0].mxu0
        %403 = vdwg.mxu0
        %v404 = vmax.f32 %v391, 0.0
        %v405 = vmax.f32 %v396, 0.0
        %v406 = vmax.f32 %v401, 0.0
        %v407 = vld [vmem:[%s3] sm:$0xff]
        %v408 = vld [vmem:[%s3 + $0x8] sm:$0xff]
        %v409 = vld [vmem:[%s3 + $0x10] sm:$0xff]
        %v410 = vld [vmem:[%s3 + $0x18] sm:$0xff]
        %v411 = vld [vmem:[%s3 + $0x20] sm:$0xff]
        %v412 = vld [vmem:[%s3 + $0x28] sm:$0xff]
        %v413 = vld [vmem:[%s3 + $0x30] sm:$0xff]
        %v414 = vld [vmem:[%s3 + $0x38] sm:$0xff]
        %v415 = vld [vmem:[%s3 + $0x40] sm:$0xff]
        %v416 = vld [vmem:[%s3 + $0x48] sm:$0xff]
        %v417 = vld [vmem:[%s3 + $0x50] sm:$0xff]
        %v418 = vld [vmem:[%s3 + $0x58] sm:$0xff]
        %v419 = vld [vmem:[%s3 + $0x60] sm:$0xff]
        %v420 = vld [vmem:[%s3 + $0x68] sm:$0xff]
        %v421 = vld [vmem:[%s3 + $0x70] sm:$0xff]
        %v422 = vld [vmem:[%s3 + $0x78] sm:$0xff]
        %v423 = vld [vmem:[%s4] sm:$0x1]
        %v425 = vlaneseq
        %v426 = vshrl.u32 %v425, 7
        %v427 = vsub.s32 0, %v426
        %v428 = vrot.slane %v423, %v427
        %430 = vmatprep.subr.mxu0 0.0
        %431 = vmatpush1.msra.mxu0 %v407
        %432 = vmatprep.subr.mxu0 0.0
        %433 = vmatpush1.msra.mxu0 %v408
        %434 = vmatprep.subr.mxu0 0.0
        %435 = vmatpush1.msra.mxu0 %v409
        %436 = vmatprep.subr.mxu0 0.0
        %437 = vmatpush1.msra.mxu0 %v410
        %438 = vmatprep.subr.mxu0 0.0
        %439 = vmatpush1.msra.mxu0 %v411
        %440 = vmatprep.subr.mxu0 0.0
        %441 = vmatpush1.msra.mxu0 %v412
        %442 = vmatprep.subr.mxu0 0.0
        %443 = vmatpush1.msra.mxu0 %v413
        %444 = vmatprep.subr.mxu0 0.0
        %445 = vmatpush1.msra.mxu0 %v414
        %446 = vmatprep.subr.mxu0 0.0
        %447 = vmatpush1.msra.mxu0 %v415
        %448 = vmatprep.subr.mxu0 0.0
        %449 = vmatpush1.msra.mxu0 %v416
        %450 = vmatprep.subr.mxu0 0.0
        %451 = vmatpush1.msra.mxu0 %v417
        %452 = vmatprep.subr.mxu0 0.0
        %453 = vmatpush1.msra.mxu0 %v418
        %454 = vmatprep.subr.mxu0 0.0
        %455 = vmatpush1.msra.mxu0 %v419
        %456 = vmatprep.subr.mxu0 0.0
        %457 = vmatpush1.msra.mxu0 %v420
        %458 = vmatprep.subr.mxu0 0.0
        %459 = vmatpush1.msra.mxu0 %v421
        %460 = vmatprep.subr.mxu0 0.0
        %461 = vmatpush1.msra.mxu0 %v422
        %462 = vmatprep.subr.mxu0 0.0
        %463 = vmatpush1.msra.mxu0 0.0
        %464 = vmatprep.subr.mxu0 0.0
        %465 = vmatpush1.msra.mxu0 0.0
        %466 = vmatprep.subr.mxu0 0.0
        %467 = vmatpush1.msra.mxu0 0.0
        %468 = vmatprep.subr.mxu0 0.0
        %469 = vmatpush1.msra.mxu0 0.0
        %470 = vmatprep.subr.mxu0 0.0
        %471 = vmatpush1.msra.mxu0 0.0
        %472 = vmatprep.subr.mxu0 0.0
        %473 = vmatpush1.msra.mxu0 0.0
        %474 = vmatprep.subr.mxu0 0.0
        %475 = vmatpush1.msra.mxu0 0.0
        %476 = vmatprep.subr.mxu0 0.0
        %477 = vmatpush1.msra.mxu0 0.0
        %478 = vmatprep.subr.mxu0 0.0
        %479 = vmatpush1.msra.mxu0 0.0
        %480 = vmatprep.subr.mxu0 0.0
        %481 = vmatpush1.msra.mxu0 0.0
        %482 = vmatprep.subr.mxu0 0.0
        %483 = vmatpush1.msra.mxu0 0.0
        %484 = vmatprep.subr.mxu0 0.0
        %485 = vmatpush1.msra.mxu0 0.0
        %486 = vmatprep.subr.mxu0 0.0
        %487 = vmatpush1.msra.mxu0 0.0
        %488 = vmatprep.subr.mxu0 0.0
        %489 = vmatpush1.msra.mxu0 0.0
        %490 = vmatprep.subr.mxu0 0.0
        %491 = vmatpush1.msra.mxu0 0.0
        %492 = vmatprep.subr.mxu0 0.0
        %493 = vmatpush1.msra.mxu0 0.0
        %494 = vmatprep.mubr.f32.mxu0 0.0
        %495 = vmatmul.mubr.f32.gmra.mrb[0].mxu0 %v404
        %v496 = vpop.f32.mrb[0].mxu0
        %v497 = vadd.f32 %v428, %v496
        %v498 = vpop.f32.mrb[0].mxu0
        %499 = vmatprep.mubr.f32.mxu0 0.0
        %500 = vmatmul.mubr.f32.gmra.mrb[0].mxu0 %v405
        %v501 = vpop.f32.mrb[0].mxu0
        %v502 = vadd.f32 %v428, %v501
        %v503 = vpop.f32.mrb[0].mxu0
        %504 = vmatprep.mubr.f32.mxu0 0.0
        %505 = vmatmul.mubr.f32.gmra.mrb[0].mxu0 %v406
        %v506 = vpop.f32.mrb[0].mxu0
        %v507 = vadd.f32 %v428, %v506
        %v508 = vpop.f32.mrb[0].mxu0
        %509 = vdwg.mxu0
        %v510 = vadd.f32 %v497, %v300
        %v511 = vadd.f32 %v502, %v301
        %v512 = vadd.f32 %v507, %v302
        %v513 = vsel %vm314, %v510, 0.0
        %514 = vadd.xlane.f32.xlu0 %v513
        %v515 = vpop.xlane.xlu0 %514
        %v516 = vsel %vm314, %v511, 0.0
        %517 = vadd.xlane.f32.xlu0 %v516
        %v518 = vpop.xlane.xlu0 %517
        %v519 = vsel %vm314, %v512, 0.0
        %520 = vadd.xlane.f32.xlu0 %v519
        %v521 = vpop.xlane.xlu0 %520
        %v522 = vrcp.pop 32.0
        %v523 = vmul.f32 %v515, %v522
        %v524 = vmul.f32 %v518, %v522
        %v525 = vmul.f32 %v521, %v522
        %v526 = vsub.f32 %v510, %v523
        %v527 = vsub.f32 %v511, %v524
        %v528 = vsub.f32 %v512, %v525
        %v529 = vmul.f32 %v526, %v526
        %v530 = vmul.f32 %v527, %v527
        %v531 = vmul.f32 %v528, %v528
        %v532 = vsel %vm314, %v529, 0.0
        %533 = vadd.xlane.f32.xlu0 %v532
        %v534 = vpop.xlane.xlu0 %533
        %v535 = vsel %vm314, %v530, 0.0
        %536 = vadd.xlane.f32.xlu0 %v535
        %v537 = vpop.xlane.xlu0 %536
        %v538 = vsel %vm314, %v531, 0.0
        %539 = vadd.xlane.f32.xlu0 %v538
        %v540 = vpop.xlane.xlu0 %539
        %v541 = vrcp.pop 31.0
        %v542 = vmul.f32 %v534, %v541
        %v543 = vmul.f32 %v537, %v541
        %v544 = vmul.f32 %v540, %v541
        %v545 = vrsqrt.pop %v542
        %v546 = vmul.f32 %v542, %v545
        %vm547 = vcmp.eq.f32.partialorder %v542, inf
        %v548 = vsel %vm547, %v542, %v546
        %vm549 = vcmp.eq.f32.partialorder %v542, 0.0
        %v550 = vand.u32 %v542, 2147483648
        %v551 = vsel %vm549, %v550, %v548
        %v552 = vrsqrt.pop %v543
        %v553 = vmul.f32 %v543, %v552
        %vm554 = vcmp.eq.f32.partialorder %v543, inf
        %v555 = vsel %vm554, %v543, %v553
        %vm556 = vcmp.eq.f32.partialorder %v543, 0.0
        %v557 = vand.u32 %v543, 2147483648
        %v558 = vsel %vm556, %v557, %v555
        %v559 = vrsqrt.pop %v544
        %v560 = vmul.f32 %v544, %v559
        %vm561 = vcmp.eq.f32.partialorder %v544, inf
        %v562 = vsel %vm561, %v544, %v560
        %vm563 = vcmp.eq.f32.partialorder %v544, 0.0
        %v564 = vand.u32 %v544, 2147483648
        %v565 = vsel %vm563, %v564, %v562
        %v566 = vadd.f32 %v551, 0.001
        %v567 = vadd.f32 %v558, 0.001
        %v568 = vadd.f32 %v565, 0.001
        %v569 = vrcp.pop %v566
        %v570 = vrcp.pop %v567
        %v571 = vrcp.pop %v568
        %v572 = vmul.f32 %v526, %v569
        %v573 = vmul.f32 %v527, %v570
        %v574 = vmul.f32 %v528, %v571
        %v575 = vld [vmem:[%s5] sm:$0x1]
        %v577 = vlaneseq
        %v578 = vshrl.u32 %v577, 7
        %v579 = vsub.s32 0, %v578
        %v580 = vrot.slane %v575, %v579
        %v582 = vmul.f32 %v572, %v580
        %v583 = vmul.f32 %v573, %v580
        %v584 = vmul.f32 %v574, %v580
        %v585 = vld [vmem:[%s6] sm:$0x1]
        %v587 = vlaneseq
        %v588 = vshrl.u32 %v587, 7
        %v589 = vsub.s32 0, %v588
        %v590 = vrot.slane %v585, %v589
        %v592 = vadd.f32 %v582, %v590
        %v593 = vadd.f32 %v583, %v590
        %v594 = vadd.f32 %v584, %v590
        %595 = vst.msk [vmem:[%s280] sm:$0xff] %vm314, %v592
        %596 = vst.msk [vmem:[%s280 + $0x8] sm:$0xff] %vm314, %v593
        %597 = vst.msk [vmem:[%s280 + $0x10] sm:$0xff] %vm314, %v594
        %s598 = sand.u32 %s178, 1
        %s599 = sand.u32 %s178, 1
        %s600 = smul.addr %s599, 24
        %s601 = scalar_lea.vmem [#allocation2], %s600
        // Predicated region
        $region49: #{tpu_custom_call.1} parent=47 // pred_check
          %p602 = pneg %p188
        $region50: #{tpu_custom_call.1} parent=47 // pred_check_branch
          %604 = sbr.rel (%p602) target = $region52
        $region51: #{tpu_custom_call.1} parent=47 // pred_region
          %s605 = smul.u32 3, %s18
          %s606 = ssub.s32 5, %s605
          %p607 = scmp.lt.s32.totalorder %s606, 3
          %s608 = scalar_select %p607, %s606, 3
          %s609 = smul.u32 128, %s608
          %p610 = scmp.ne.s32.totalorder 0, %s609
          %s611 = smul.addr %s605, 8
          %s612 = scalar_lea.vmem %s7, %s611
          // Predicated region
          $region53: #{tpu_custom_call.1} parent=51 // pred_check
            %p613 = pneg %p610
          $region54: #{tpu_custom_call.1} parent=51 // pred_check_branch
            %615 = sbr.rel (%p613) target = $region56
          $region55: #{tpu_custom_call.1} parent=51 // pred_region
            // Predicated region
            $region57: #{tpu_custom_call.1} parent=55 // pred_check
              _
            $region58: #{tpu_custom_call.1} parent=55 // pred_check_branch
              %617 = sbr.rel (0) target = $region60
            $region59: #{tpu_custom_call.1} parent=55 // pred_region
              // Predicated region
              $region79: #{tpu_custom_call.1} parent=59 // pred_check
                _
              $region80: #{tpu_custom_call.1} parent=59 // pred_check_branch
                %671 = sbr.rel (0) target = $region82
              $region81: #{tpu_custom_call.1} parent=59 // pred_region
                %s672 = sdiv.u32.pop %s608, 3
                %s673 = srem.u32.pop %s608, 3
                // While loop
                $region83: #{tpu_custom_call.1} parent=81 // loop_pre_header
                  _
                $region84: #{tpu_custom_call.1} parent=81 // loop_header
                  %s675 = sphi 0, %s677
                  %p676 = scmp.ge.s32.totalorder %s675, %s672
                  %s680 = sphi 0, %s691
                  %s681 = sphi %s601, %s694
                  %s682 = sphi %s612, %s695
                $region85: #{tpu_custom_call.1} parent=81 // loop_header_branch
                  %679 = sbr.rel (%p676) target = $region89
                $region86: #{tpu_custom_call.1} parent=81 // loop_body
                  %v683 = vld [vmem:[%s681] sm:$0xff]
                  %684 = vst [vmem:[%s682] sm:$0xff] %v683
                  %v685 = vld [vmem:[%s681 + $0x8] sm:$0xff]
                  %686 = vst [vmem:[%s682 + $0x8] sm:$0xff] %v685
                  %v687 = vld [vmem:[%s681 + $0x10] sm:$0xff]
                  %688 = vst [vmem:[%s682 + $0x10] sm:$0xff] %v687
                  %s689 = sadd.s32 1, %s680
                  %p690 = scmp.ge.s32.totalorder %s689, %s672
                  %s691 = scalar_select %p690, 0, %s689
                  %s692 = smul.u32 %s691, 24
                  %s693 = smul.u32 %s691, 24
                  %s694 = scalar_lea.vmem %s601, %s692 [#allocation2]
                  %s695 = scalar_lea.vmem %s612, %s693
                $region87: #{tpu_custom_call.1} parent=81 // loop_footer
                  %s677 = sadd.s32 %s675, 1
                $region88: #{tpu_custom_call.1} parent=81 // loop_footer_branch
                  %674 = sbr.rel target = $region84
                $region89: #{tpu_custom_call.1} parent=81 // loop_exit
                  _
                %s696 = sdiv.u32.pop %s608, 3
                %s697 = srem.u32.pop %s608, 3
                %s698 = smul.u32 %s696, 3
                %s699 = smul.u32 8, %s698
                %s700 = scalar_lea.vmem %s601, %s699 [#allocation2]
                %s701 = smul.u32 8, %s698
                %s702 = scalar_lea.vmem %s612, %s701
                // While loop
                $region90: #{tpu_custom_call.1} parent=81 // loop_pre_header
                  _
                $region91: #{tpu_custom_call.1} parent=81 // loop_header
                  %s704 = sphi 0, %s706
                  %p705 = scmp.ge.s32.totalorder %s704, %s697
                  %s709 = sphi 0, %s716
                  %s710 = sphi %s700, %s719
                  %s711 = sphi %s702, %s720
                $region92: #{tpu_custom_call.1} parent=81 // loop_header_branch
                  %708 = sbr.rel (%p705) target = $region96
                $region93: #{tpu_custom_call.1} parent=81 // loop_body
                  %v712 = vld [vmem:[%s710] sm:$0xff]
                  %713 = vst [vmem:[%s711] sm:$0xff] %v712
                  %s714 = sadd.s32 1, %s709
                  %p715 = scmp.ge.s32.totalorder %s714, %s697
                  %s716 = scalar_select %p715, 0, %s714
                  %s717 = smul.u32 %s716, 8
                  %s718 = smul.u32 %s716, 8
                  %s719 = scalar_lea.vmem %s700, %s717 [#allocation2]
                  %s720 = scalar_lea.vmem %s702, %s718
                $region94: #{tpu_custom_call.1} parent=81 // loop_footer
                  %s706 = sadd.s32 %s704, 1
                $region95: #{tpu_custom_call.1} parent=81 // loop_footer_branch
                  %703 = sbr.rel target = $region91
                $region96: #{tpu_custom_call.1} parent=81 // loop_exit
                  _
              $region82: #{tpu_custom_call.1} parent=59 // pred_fallthru
                _
              // Predicated region
              $region97: #{tpu_custom_call.1} parent=59 // pred_check
                _
              $region98: #{tpu_custom_call.1} parent=59 // pred_check_branch
                %722 = sbr.rel target = $region100
              $region99: #{tpu_custom_call.1} parent=59 // pred_region
                _
              $region100: #{tpu_custom_call.1} parent=59 // pred_fallthru
                _
            $region60: #{tpu_custom_call.1} parent=55 // pred_fallthru
              _
            // Predicated region
            $region61: #{tpu_custom_call.1} parent=55 // pred_check
              _
            $region62: #{tpu_custom_call.1} parent=55 // pred_check_branch
              %619 = sbr.rel target = $region64
            $region63: #{tpu_custom_call.1} parent=55 // pred_region
              %s621 = sdiv.u32.pop %s608, 3
              %s622 = srem.u32.pop %s608, 3
              // While loop
              $region65: #{tpu_custom_call.1} parent=63 // loop_pre_header
                _
              $region66: #{tpu_custom_call.1} parent=63 // loop_header
                %s624 = sphi 0, %s626
                %p625 = scmp.ge.s32.totalorder %s624, %s621
                %s629 = sphi 0, %s640
                %s630 = sphi %s601, %s643
                %s631 = sphi %s612, %s644
              $region67: #{tpu_custom_call.1} parent=63 // loop_header_branch
                %628 = sbr.rel (%p625) target = $region71
              $region68: #{tpu_custom_call.1} parent=63 // loop_body
                %v632 = vld [vmem:[%s630] sm:$0xff]
                %633 = vst [vmem:[%s631] sm:$0xff] %v632
                %v634 = vld [vmem:[%s630 + $0x8] sm:$0xff]
                %635 = vst [vmem:[%s631 + $0x8] sm:$0xff] %v634
                %v636 = vld [vmem:[%s630 + $0x10] sm:$0xff]
                %637 = vst [vmem:[%s631 + $0x10] sm:$0xff] %v636
                %s638 = sadd.s32 1, %s629
                %p639 = scmp.ge.s32.totalorder %s638, %s621
                %s640 = scalar_select %p639, 0, %s638
                %s641 = smul.u32 %s640, 24
                %s642 = smul.u32 %s640, 24
                %s643 = scalar_lea.vmem %s601, %s641 [#allocation2]
                %s644 = scalar_lea.vmem %s612, %s642
              $region69: #{tpu_custom_call.1} parent=63 // loop_footer
                %s626 = sadd.s32 %s624, 1
              $region70: #{tpu_custom_call.1} parent=63 // loop_footer_branch
                %623 = sbr.rel target = $region66
              $region71: #{tpu_custom_call.1} parent=63 // loop_exit
                _
              %s645 = sdiv.u32.pop %s608, 3
              %s646 = srem.u32.pop %s608, 3
              %s647 = smul.u32 %s645, 3
              %s648 = smul.u32 8, %s647
              %s649 = scalar_lea.vmem %s601, %s648 [#allocation2]
              %s650 = smul.u32 8, %s647
              %s651 = scalar_lea.vmem %s612, %s650
              // While loop
              $region72: #{tpu_custom_call.1} parent=63 // loop_pre_header
                _
              $region73: #{tpu_custom_call.1} parent=63 // loop_header
                %s653 = sphi 0, %s655
                %p654 = scmp.ge.s32.totalorder %s653, %s646
                %s658 = sphi 0, %s665
                %s659 = sphi %s649, %s668
                %s660 = sphi %s651, %s669
              $region74: #{tpu_custom_call.1} parent=63 // loop_header_branch
                %657 = sbr.rel (%p654) target = $region78
              $region75: #{tpu_custom_call.1} parent=63 // loop_body
                %v661 = vld [vmem:[%s659] sm:$0xff]
                %662 = vst [vmem:[%s660] sm:$0xff] %v661
                %s663 = sadd.s32 1, %s658
                %p664 = scmp.ge.s32.totalorder %s663, %s646
                %s665 = scalar_select %p664, 0, %s663
                %s666 = smul.u32 %s665, 8
                %s667 = smul.u32 %s665, 8
                %s668 = scalar_lea.vmem %s649, %s666 [#allocation2]
                %s669 = scalar_lea.vmem %s651, %s667
              $region76: #{tpu_custom_call.1} parent=63 // loop_footer
                %s655 = sadd.s32 %s653, 1
              $region77: #{tpu_custom_call.1} parent=63 // loop_footer_branch
                %652 = sbr.rel target = $region73
              $region78: #{tpu_custom_call.1} parent=63 // loop_exit
                _
            $region64: #{tpu_custom_call.1} parent=55 // pred_fallthru
              _
          $region56: #{tpu_custom_call.1} parent=51 // pred_fallthru
            _
          %723 = vnop
        $region52: #{tpu_custom_call.1} parent=47 // pred_fallthru
          _
      $region48: #{tpu_custom_call.1} parent=5 // pred_fallthru
        _
      %p724 = scmp.le.s32.totalorder 2, %s13
      // Predicated region
      $region101: #{tpu_custom_call.1} parent=5 // pred_check
        %p725 = pneg %p724
      $region102: #{tpu_custom_call.1} parent=5 // pred_check_branch
        %727 = sbr.rel (%p725) target = $region104
      $region103: #{tpu_custom_call.1} parent=5 // pred_region
        %s728 = ssub.s32 %s13, 2
        // Predicated region
        $region105: #{tpu_custom_call.1} parent=103 // pred_check
          %p729 = pneg %p194
        $region106: #{tpu_custom_call.1} parent=103 // pred_check_branch
          %731 = sbr.rel (%p729) target = $region108
        $region107: #{tpu_custom_call.1} parent=103 // pred_region
          %s732 = sand.u32 %s179, 1
          %s733 = sand.u32 %s179, 1
          %s734 = smul.addr %s733, 24
          %s735 = scalar_lea.vmem [#allocation2], %s734
        $region108: #{tpu_custom_call.1} parent=103 // pred_fallthru
          _
      $region104: #{tpu_custom_call.1} parent=5 // pred_fallthru
        _
    $region6: #{tpu_custom_call.1} parent=1 // loop_footer
      %s17 = sadd.s32 1, %s13
    $region7: #{tpu_custom_call.1} parent=1 // loop_footer_branch
      %12 = sbr.rel target = $region3
    $region8: #{tpu_custom_call.1} parent=1 // loop_exit
      _

</llo_original>
